<compile_context>
chip_gen: v7x
topology: tpu7x:2x2x1
jax: 0.10.0
libtpu: 0.0.40
codegen_flags: <defaults>
</compile_context>

<pallas_src>
import jax
import jax.numpy as jnp
from jax.experimental import pallas as pl
from jax.experimental.pallas import tpu as pltpu


def _round_up(x, m):
    return ((x + m - 1) // m) * m


def _unembed_kernel(x_ref, w_ref, b_ref, o_ref):
    # x_ref: (tm, K), w_ref: (K, tn), b_ref: (1, tn) f32, o_ref: (tm, tn)
    acc = jnp.dot(x_ref[...], w_ref[...], preferred_element_type=jnp.float32)
    o_ref[...] = (acc + b_ref[...]).astype(o_ref.dtype)


def token_unembedding(embedding, weight_t, bias, *, tm=None, tn=None,
                      compute_dtype=jnp.bfloat16,
                      vmem_limit_bytes=48 * 1024 * 1024):
    """embedding: [B, S, K]; weight_t: [K, V]; bias: [V]. Returns logits [B, S, V].

    compute_dtype: dtype fed to the MXU (f32 accumulation regardless).  Pass
    jnp.float32 (or the input dtype) to disable the bf16 cast.
    """
    B, S, K = embedding.shape
    Kw, V = weight_t.shape
    assert K == Kw, f"embed_dim mismatch: {K} vs {Kw}"
    out_dtype = embedding.dtype
    M = B * S

    x = embedding.reshape(M, K)
    w = weight_t
    if compute_dtype is not None:
        x = x.astype(compute_dtype)
        w = w.astype(compute_dtype)
    b2 = bias.astype(jnp.float32).reshape(1, V)

    in_itemsize = jnp.dtype(x.dtype).itemsize
    out_itemsize = jnp.dtype(out_dtype).itemsize

    # ---- tile selection -------------------------------------------------
    auto_tm = tm is None
    auto_tn = tn is None
    if auto_tn:
        tn = min(_round_up(V, 128), 1024)      # lane/MXU aligned vocab tile
    else:
        tn = _round_up(tn, 128)
    if auto_tm:
        tm = min(_round_up(M, 16), 512)        # cover M if possible -> weight read once
    else:
        tm = _round_up(tm, 16)

    # Double-buffered per-step VMEM footprint for (x tile, w tile, bias tile, out tile).
    def _footprint(tm_, tn_):
        return 2 * (tm_ * K * in_itemsize + K * tn_ * in_itemsize
                    + tn_ * 4 + tm_ * tn_ * out_itemsize)

    budget = int(vmem_limit_bytes * 0.75)      # headroom under the scoped limit
    if auto_tn:
        # Shrinking tn does not increase total weight HBM traffic; prefer it first.
        while _footprint(tm, tn) > budget and tn > 256:
            tn = max(256, _round_up(tn // 2, 128))
    if auto_tm:
        while _footprint(tm, tn) > budget and tm > 16:
            tm = max(16, _round_up(tm // 2, 16))
    if auto_tn:
        while _footprint(tm, tn) > budget and tn > 128:
            tn = 128

    # ---- padding to tile multiples --------------------------------------
    M_pad = _round_up(M, tm)
    V_pad = _round_up(V, tn)
    if M_pad != M:
        x = jnp.pad(x, ((0, M_pad - M), (0, 0)))
    if V_pad != V:
        w = jnp.pad(w, ((0, 0), (0, V_pad - V)))
        b2 = jnp.pad(b2, ((0, 0), (0, V_pad - V)))

    grid = (M_pad // tm, V_pad // tn)          # i outer (M), j inner (V):
                                               # activation tile stays resident
                                               # across the vocab sweep.
    out = pl.pallas_call(
        _unembed_kernel,
        out_shape=jax.ShapeDtypeStruct((M_pad, V_pad), out_dtype),
        grid_spec=pltpu.PrefetchScalarGridSpec(
            num_scalar_prefetch=0,
            grid=grid,
            in_specs=[
                pl.BlockSpec((tm, K), lambda i, j: (i, 0)),   # activation tile
                pl.BlockSpec((K, tn), lambda i, j: (0, j)),   # weight tile (K x V)
                pl.BlockSpec((1, tn), lambda i, j: (0, j)),   # bias tile (f32)
            ],
            out_specs=pl.BlockSpec((tm, tn), lambda i, j: (i, j)),
        ),
        compiler_params=pltpu.CompilerParams(
            dimension_semantics=("parallel", "parallel"),
            vmem_limit_bytes=vmem_limit_bytes,
        ),
    )(x, w, b2)

    if M_pad != M or V_pad != V:
        out = out[:M, :V]
    return out.reshape(B, S, V)


def init_params(key, vocab_size, embed_dim, dtype=jnp.float32):
    """Deterministic init mimicking nn.Linear default (uniform +/- 1/sqrt(fan_in))."""
    kw, kb = jax.random.split(key)
    bound = 1.0 / (embed_dim ** 0.5)
    # PyTorch stores weight as (vocab_size, embed_dim); we keep the transposed
    # (embed_dim, vocab_size) layout for a direct MXU matmul.
    weight_t = jax.random.uniform(kw, (embed_dim, vocab_size), dtype, -bound, bound)
    bias = jax.random.uniform(kb, (vocab_size,), dtype, -bound, bound)
    return weight_t, bias


if __name__ == "__main__":
    key = jax.random.PRNGKey(0)
    k_x, k_p, k_x2, k_p2 = jax.random.split(key, 4)

    batch, seq, embed_dim, vocab_size = 2, 8, 32, 128
    embedding = jax.random.normal(k_x, (batch, seq, embed_dim), jnp.float32)
    weight_t, bias = init_params(k_p, vocab_size, embed_dim)
    ref = embedding @ weight_t + bias

    # 1) exact f32 path
    logits_f32 = jax.block_until_ready(
        token_unembedding(embedding, weight_t, bias, compute_dtype=jnp.float32))
    assert logits_f32.shape == (batch, seq, vocab_size)
    assert jnp.allclose(logits_f32, ref, atol=1e-5, rtol=1e-5)

    # 2) default bf16-on-MXU path (f32 accumulation)
    logits_bf16 = jax.block_until_ready(token_unembedding(embedding, weight_t, bias))
    assert logits_bf16.shape == (batch, seq, vocab_size)
    assert jnp.allclose(logits_bf16, ref, atol=5e-2, rtol=5e-2)

    # 3) ragged batch*seq / vocab exercises the padding path
    b2, s2, k2, v2 = 2, 9, 32, 200
    emb2 = jax.random.normal(k_x2, (b2, s2, k2), jnp.float32)
    w2, bias2 = init_params(k_p2, v2, k2)
    ref2 = emb2 @ w2 + bias2
    out2 = jax.block_until_ready(token_unembedding(emb2, w2, bias2))
    assert out2.shape == (b2, s2, v2)
    assert jnp.allclose(out2, ref2, atol=5e-2, rtol=5e-2)

    print("KERNEL_OK")
</pallas_src>

<mosaic_0001>
module attributes {stable_mosaic.version = 11 : i64} {
  func.func @_unembed_kernel(%arg0: i32, %arg1: i32, %arg2: memref<16x32xf32, #tpu.memory_space<vmem>>, %arg3: memref<32x128xf32, #tpu.memory_space<vmem>>, %arg4: memref<1x128xf32, #tpu.memory_space<vmem>>, %arg5: memref<16x128xf32, #tpu.memory_space<vmem>>) attributes {dimension_semantics = [#tpu.dimension_semantics<parallel>, #tpu.dimension_semantics<parallel>], iteration_bounds = array<i64: 1, 1>, scalar_prefetch = 0 : i64, scratch_operands = 0 : i64, tpu.core_type = #tpu.core_type<tc>, window_params = [{transform_indices = @transform_0, window_bounds = array<i64: 16, 32>}, {transform_indices = @transform_1, window_bounds = array<i64: 32, 128>}, {transform_indices = @transform_2, window_bounds = array<i64: 1, 128>}, {transform_indices = @transform_3, window_bounds = array<i64: 16, 128>}]} {
    %c0 = arith.constant 0 : index
    %c0_0 = arith.constant 0 : index
    %0 = vector.load %arg2[%c0, %c0_0] : memref<16x32xf32, #tpu.memory_space<vmem>>, vector<16x32xf32>
    %c0_1 = arith.constant 0 : index
    %c0_2 = arith.constant 0 : index
    %1 = vector.load %arg3[%c0_1, %c0_2] : memref<32x128xf32, #tpu.memory_space<vmem>>, vector<32x128xf32>
    %cst = arith.constant dense<0.000000e+00> : vector<16x128xf32>
    %2 = tpu.matmul %0, %1, %cst {dimension_numbers = #tpu.dot_dimension_numbers<[1], [0], [0], [1], [0, 0, 1, 1], [], []>} : vector<16x32xf32>, vector<32x128xf32>, vector<16x128xf32> -> vector<16x128xf32>
    %c0_3 = arith.constant 0 : index
    %c0_4 = arith.constant 0 : index
    %3 = vector.load %arg4[%c0_3, %c0_4] : memref<1x128xf32, #tpu.memory_space<vmem>>, vector<1x128xf32>
    %4 = vector.broadcast %3 : vector<1x128xf32> to vector<16x128xf32>
    %5 = arith.addf %2, %4 : vector<16x128xf32>
    %c0_5 = arith.constant 0 : index
    %c0_6 = arith.constant 0 : index
    %6 = vector.load %arg5[%c0_5, %c0_6] : memref<16x128xf32, #tpu.memory_space<vmem>>, vector<16x128xf32>
    tpu.vector_store %arg5[%c0_5, %c0_6], %5 {strides = array<i32>} : memref<16x128xf32, #tpu.memory_space<vmem>>, vector<16x128xf32>,
    return
  }
  func.func @transform_0(%arg0: i32, %arg1: i32) -> (i32, i32) {
    %c0_i32 = arith.constant 0 : i32
    %c0_i32_0 = arith.constant 0 : i32
    return %arg0, %c0_i32 : i32, i32
  }
  func.func @transform_1(%arg0: i32, %arg1: i32) -> (i32, i32) {
    %c0_i32 = arith.constant 0 : i32
    %c0_i32_0 = arith.constant 0 : i32
    return %c0_i32, %arg1 : i32, i32
  }
  func.func @transform_2(%arg0: i32, %arg1: i32) -> (i32, i32) {
    %c0_i32 = arith.constant 0 : i32
    %c0_i32_0 = arith.constant 0 : i32
    return %c0_i32, %arg1 : i32, i32
  }
  func.func @transform_3(%arg0: i32, %arg1: i32) -> (i32, i32) {
    %c0_i32 = arith.constant 0 : i32
    return %arg0, %arg1 : i32, i32
  }
}

</mosaic_0001>

<llo_original>
// kernel: tpu_custom_call.1
$region0: #{tpu_custom_call.1}
  #allocation0 [shape = 'u32[]', space=smem, size = 0x4, offset = 0x4, fixed_abs, tag = 'smem constant byte address 0x4 - core index']
  #allocation1 [shape = 'u32[144,128]{1,0:T(1,128)}', space=vmem, size = 0x12000, scoped, tag = 'internal scratch']
  %s0 = inlined_call_operand.hbm [shape: f32[16,32], index: 0, kind: input, shape index: {}]
  %s1 = inlined_call_operand.hbm [shape: f32[32,128], index: 1, kind: input, shape index: {}]
  %s2 = inlined_call_operand.vmem [shape: f32[1,128], index: 2, kind: input, shape index: {}]
  %s3 = inlined_call_operand.hbm [shape: f32[16,128], index: 3, kind: output, shape index: {}]
  %s4 = sld [smem:[#allocation0]]
  $region30: #{tpu_custom_call.1} parent=0
    _
  %s6 = ssub.s32 1, %s4
  %s7 = scalar_select 0, %s6, %s4
  $region1: #{tpu_custom_call.1} parent=0
    #allocation2 [shape = 'u8[8192]{0}', space=vmem, size = 0x2000, scoped, tag = 'input window, operand 0, single buffered']
    #allocation3 [shape = 's32[1]{0}', space=sflag, size = 0x4, scoped, tag = 'scoped memory for tpu_custom_call.1']
    #allocation4 [shape = 's32[1]{0}', space=sflag, size = 0x4, scoped, tag = 'scoped memory for tpu_custom_call.1']
    #allocation5 [shape = 'u8[16384]{0}', space=vmem, size = 0x4000, scoped, tag = 'input window, operand 1, single buffered']
    #allocation6 [shape = 's32[1]{0}', space=sflag, size = 0x4, scoped, tag = 'scoped memory for tpu_custom_call.1']
    #allocation7 [shape = 'u8[8192]{0}', space=vmem, size = 0x2000, scoped, tag = 'output window, operand 0, single buffered']
    %8 = vsyncpa [#allocation3], 0
    %9 = vsyncpa [#allocation6], 0
    %10 = vsyncpa [#allocation4], 0
    // Predicated region
    $region2: #{tpu_custom_call.1} parent=1 // pred_check
      _
    $region3: #{tpu_custom_call.1} parent=1 // pred_check_branch
      %12 = sbr.rel (0) target = $region5
    $region4: #{tpu_custom_call.1} parent=1 // pred_region
      %s14 = ssub.s32 256, 256
      %15 = vsyncadd [#allocation3], %s14
      %s16 = sshll.u32 [#allocation2], 4
      %s17 = int_to_ptr.vmem [resolvable:$true] %s16
      %22 = dma.hbm_to_vmem [thread:$0]  %s0, 256, %s17, [#allocation3], 128, 128, 8
    $region5: #{tpu_custom_call.1} parent=1 // pred_fallthru
      _
    // Predicated region
    $region6: #{tpu_custom_call.1} parent=1 // pred_check
      _
    $region7: #{tpu_custom_call.1} parent=1 // pred_check_branch
      %24 = sbr.rel (0) target = $region9
    $region8: #{tpu_custom_call.1} parent=1 // pred_region
      %s26 = ssub.s32 512, 512
      %27 = vsyncadd [#allocation6], %s26
      %s28 = sshll.u32 [#allocation5], 4
      %s29 = int_to_ptr.vmem [resolvable:$true] %s28
      %34 = dma.hbm_to_vmem [thread:$0]  %s1, 512, %s29, [#allocation6], 128, 128, 8
    $region9: #{tpu_custom_call.1} parent=1 // pred_fallthru
      _
    // Predicated region
    $region10: #{tpu_custom_call.1} parent=1 // pred_check
      _
    $region11: #{tpu_custom_call.1} parent=1 // pred_check_branch
      %36 = sbr.rel (0) target = $region13
    $region12: #{tpu_custom_call.1} parent=1 // pred_region
      _
    $region13: #{tpu_custom_call.1} parent=1 // pred_fallthru
      _
    // Predicated region
    $region14: #{tpu_custom_call.1} parent=1 // pred_check
      _
    $region15: #{tpu_custom_call.1} parent=1 // pred_check_branch
      %38 = sbr.rel (0) target = $region17
    $region16: #{tpu_custom_call.1} parent=1 // pred_region
      %39 = dma.done [#allocation3], 256
    $region17: #{tpu_custom_call.1} parent=1 // pred_fallthru
      _
    // Predicated region
    $region18: #{tpu_custom_call.1} parent=1 // pred_check
      _
    $region19: #{tpu_custom_call.1} parent=1 // pred_check_branch
      %41 = sbr.rel (0) target = $region21
    $region20: #{tpu_custom_call.1} parent=1 // pred_region
      %42 = dma.done [#allocation6], 512
    $region21: #{tpu_custom_call.1} parent=1 // pred_fallthru
      _
    %v43 = vld [vmem:[#allocation2] sm:$0xff]
    %v44 = vld [vmem:[#allocation2 + $0x8] sm:$0xff]
    %v45 = vld [vmem:[#allocation5] sm:$0xff]
    %v46 = vld [vmem:[#allocation5 + $0x8] sm:$0xff]
    %v47 = vld [vmem:[#allocation5 + $0x10] sm:$0xff]
    %v48 = vld [vmem:[#allocation5 + $0x18] sm:$0xff]
    %v49 = vld [vmem:[%s2] sm:$0x1]
    %v51 = vlaneseq
    %v52 = vshrl.u32 %v51, 7
    %v53 = vsub.s32 0, %v52
    %v54 = vrot.slane %v49, %v53
    %vm56 = vcmask 261120
    %v58 = vsel %vm56, %v43, 0
    %v61 = vsel %vm56, %v44, 0
    %63 = vmatprep.subr.mxu0 0.0
    %64 = vmatpush1.msra.mxu0 %v45
    %65 = vmatprep.subr.mxu0 0.0
    %66 = vmatpush1.msra.mxu0 %v46
    %67 = vmatprep.subr.mxu0 0.0
    %68 = vmatpush1.msra.mxu0 %v47
    %69 = vmatprep.subr.mxu0 0.0
    %70 = vmatpush1.msra.mxu0 %v48
    %71 = vmatprep.subr.mxu0 0.0
    %72 = vmatpush1.msra.mxu0 0.0
    %73 = vmatprep.subr.mxu0 0.0
    %74 = vmatpush1.msra.mxu0 0.0
    %75 = vmatprep.subr.mxu0 0.0
    %76 = vmatpush1.msra.mxu0 0.0
    %77 = vmatprep.subr.mxu0 0.0
    %78 = vmatpush1.msra.mxu0 0.0
    %79 = vmatprep.subr.mxu0 0.0
    %80 = vmatpush1.msra.mxu0 0.0
    %81 = vmatprep.subr.mxu0 0.0
    %82 = vmatpush1.msra.mxu0 0.0
    %83 = vmatprep.subr.mxu0 0.0
    %84 = vmatpush1.msra.mxu0 0.0
    %85 = vmatprep.subr.mxu0 0.0
    %86 = vmatpush1.msra.mxu0 0.0
    %87 = vmatprep.subr.mxu0 0.0
    %88 = vmatpush1.msra.mxu0 0.0
    %89 = vmatprep.subr.mxu0 0.0
    %90 = vmatpush1.msra.mxu0 0.0
    %91 = vmatprep.subr.mxu0 0.0
    %92 = vmatpush1.msra.mxu0 0.0
    %93 = vmatprep.subr.mxu0 0.0
    %94 = vmatpush1.msra.mxu0 0.0
    %95 = vmatprep.subr.mxu0 0.0
    %96 = vmatpush1.msra.mxu0 0.0
    %97 = vmatprep.subr.mxu0 0.0
    %98 = vmatpush1.msra.mxu0 0.0
    %99 = vmatprep.subr.mxu0 0.0
    %100 = vmatpush1.msra.mxu0 0.0
    %101 = vmatprep.subr.mxu0 0.0
    %102 = vmatpush1.msra.mxu0 0.0
    %103 = vmatprep.subr.mxu0 0.0
    %104 = vmatpush1.msra.mxu0 0.0
    %105 = vmatprep.subr.mxu0 0.0
    %106 = vmatpush1.msra.mxu0 0.0
    %107 = vmatprep.subr.mxu0 0.0
    %108 = vmatpush1.msra.mxu0 0.0
    %109 = vmatprep.subr.mxu0 0.0
    %110 = vmatpush1.msra.mxu0 0.0
    %111 = vmatprep.subr.mxu0 0.0
    %112 = vmatpush1.msra.mxu0 0.0
    %113 = vmatprep.subr.mxu0 0.0
    %114 = vmatpush1.msra.mxu0 0.0
    %115 = vmatprep.subr.mxu0 0.0
    %116 = vmatpush1.msra.mxu0 0.0
    %117 = vmatprep.subr.mxu0 0.0
    %118 = vmatpush1.msra.mxu0 0.0
    %119 = vmatprep.subr.mxu0 0.0
    %120 = vmatpush1.msra.mxu0 0.0
    %121 = vmatprep.subr.mxu0 0.0
    %122 = vmatpush1.msra.mxu0 0.0
    %123 = vmatprep.subr.mxu0 0.0
    %124 = vmatpush1.msra.mxu0 0.0
    %125 = vmatprep.subr.mxu0 0.0
    %126 = vmatpush1.msra.mxu0 0.0
    %127 = vmatprep.mubr.f32.mxu0 0.0
    %128 = vmatmul.mubr.f32.gmra.mrb[0].mxu0 %v58
    %v129 = vpop.f32.mrb[0].mxu0
    %v130 = vadd.f32 %v54, %v129
    %v131 = vpop.f32.mrb[0].mxu0
    %132 = vmatprep.mubr.f32.mxu0 0.0
    %133 = vmatmul.mubr.f32.gmra.mrb[0].mxu0 %v61
    %v134 = vpop.f32.mrb[0].mxu0
    %v135 = vadd.f32 %v54, %v134
    %v136 = vpop.f32.mrb[0].mxu0
    %137 = vdwg.mxu0
    %138 = vst [vmem:[#allocation7] sm:$0xff] %v130
    %139 = vst [vmem:[#allocation7 + $0x8] sm:$0xff] %v135
    // Predicated region
    $region22: #{tpu_custom_call.1} parent=1 // pred_check
      _
    $region23: #{tpu_custom_call.1} parent=1 // pred_check_branch
      %141 = sbr.rel (0) target = $region25
    $region24: #{tpu_custom_call.1} parent=1 // pred_region
      %s143 = ssub.s32 256, 256
      %144 = vsyncadd [#allocation4], %s143
      %s145 = sshll.u32 [#allocation7], 4
      %s146 = int_to_ptr.vmem [resolvable:$true] %s145
      %151 = dma.vmem_to_hbm [thread:$0]  %s146, 256, %s3, [#allocation4], 128, 128, 8
    $region25: #{tpu_custom_call.1} parent=1 // pred_fallthru
      _
    // Predicated region
    $region26: #{tpu_custom_call.1} parent=1 // pred_check
      _
    $region27: #{tpu_custom_call.1} parent=1 // pred_check_branch
      %153 = sbr.rel (0) target = $region29
    $region28: #{tpu_custom_call.1} parent=1 // pred_region
      %154 = dma.done [#allocation4], 256
    $region29: #{tpu_custom_call.1} parent=1 // pred_fallthru
      _
    %155 = vsyncpa [#allocation3], 1
    %156 = vsyncpa [#allocation6], 1
    %157 = vsyncpa [#allocation4], 1

</llo_original>
